<compile_context>
chip_gen: v5e
topology: v5e:2x2
jax: 0.10.0
libtpu: 0.0.40
codegen_flags: <defaults>
</compile_context>

<pallas_src>
import jax
import jax.numpy as jnp
from jax.experimental import pallas as pl
from jax.experimental.pallas import tpu as pltpu


def build_pe(embed_size: int, max_len: int, dtype=jnp.float32):
    """Positional-encoding buffer, shape (embed_size, max_len).

    Built in f32 (like the PyTorch buffer) then cast to `dtype` (default f32,
    which preserves PyTorch parity for the add even with bf16 activations).
    """
    # The PyTorch loop writes pe[i+1] for i in range(0, E, 2); odd E would
    # index out of bounds there too, so require even E.
    assert embed_size % 2 == 0, "embed_size must be even (matches PyTorch module)"
    pos = jnp.arange(max_len, dtype=jnp.float32)                      # (L,)
    i = jnp.arange(0, embed_size, 2, dtype=jnp.float32)               # (E/2,)
    div_even = 10000.0 ** (2.0 * i / embed_size)                      # (E/2,)
    div_odd = 10000.0 ** (2.0 * (i + 1.0) / embed_size)               # (E/2,)
    pe_even = jnp.sin(pos[None, :] / div_even[:, None])               # (E/2, L)
    pe_odd = jnp.cos(pos[None, :] / div_odd[:, None])                 # (E/2, L)
    pe = jnp.zeros((embed_size, max_len), dtype=jnp.float32)
    pe = pe.at[0::2, :].set(pe_even)
    pe = pe.at[1::2, :].set(pe_odd)
    return pe.astype(dtype)


def _pe_add_kernel(x_ref, pe_ref, o_ref):
    # x_ref: (Bt, Cb, Lt), pe_ref: (E, Lt), o_ref: (Bt, E, Lt).
    # Cb is either E (E % 8 == 0: narrow sublane block, unused rows never
    # DMA'd) or the full channel count C (E % 8 != 0), in which case the
    # channel slice happens here on the VMEM tile -- no extra HBM pass.
    e = o_ref.shape[1]
    o_ref[...] = (x_ref[:, :e, :] + pe_ref[...][None]).astype(o_ref.dtype)


def _round_up(a: int, m: int) -> int:
    return (a + m - 1) // m * m


def positional_encoding_forward(x, pe, *, lane_tile: int = 2048, force_pallas=None):
    """out = x[:, :E, :] + pe[None].  x: (B, C, L) with C >= E; pe: (E, L), L == max_len."""
    B, C, L = x.shape
    E, Lp = pe.shape
    assert L == Lp, "kernel models the seq_len == max_len case (see module note)"
    assert C >= E

    x_itemsize = jnp.dtype(x.dtype).itemsize
    pe_itemsize = jnp.dtype(pe.dtype).itemsize
    out_dtype = jnp.result_type(x.dtype, pe.dtype)
    o_itemsize = jnp.dtype(out_dtype).itemsize
    out_bytes = B * E * L * o_itemsize

    use_pallas = force_pallas
    if use_pallas is None:
        # pallas_call launch + grid setup exceeds the whole add at tiny sizes.
        use_pallas = out_bytes >= (256 << 10)
    if not use_pallas:
        return x[:, :E, :] + pe[None, :, :]

    # ---- tiling --------------------------------------------------------------
    # Channel (sublane) block: E directly if it satisfies the 8-divisibility
    # rule, else the full C (legal: equals the array dim) with in-kernel slice.
    Cb = E if (E % 8 == 0) else C

    # Lane-dense L tile: multiple of 128; no wrapper-side padding -- the grid
    # uses cdiv and Pallas masks the ragged tail tile's stores.
    Lt = min(_round_up(L, 128), _round_up(lane_tile, 128))
    if pl.cdiv(L, Lt) < 2 and L > 128:
        # Keep >= 2 L tiles so both v7x TensorCores get work under "parallel".
        Lt = _round_up(pl.cdiv(L, 2), 128)

    # VMEM budget from the actual chip (64 MiB on v7x, 128 MiB on v5e/v6e);
    # conservative v7x fallback if the query is unavailable.
    vmem_cap = 64 << 20
    try:
        info = pltpu.get_tpu_info()
        vmem_cap = int(getattr(info, "vmem_capacity_bytes", vmem_cap))
    except Exception:
        pass
    budget = int(vmem_cap * 0.6)  # headroom for Mosaic internal scratch

    def live_bytes(bt, lt):
        # double-buffered x and out blocks + double-buffered (batch-resident) pe
        return 2 * bt * lt * (Cb * x_itemsize + E * o_itemsize) + 2 * E * lt * pe_itemsize

    # Fold as much of the batch as fits into one block (amortizes per-step
    # overhead; pe is re-read from VMEM, not HBM, across the folded batch).
    Bt = B
    while Bt > 1 and live_bytes(Bt, Lt) > budget:
        Bt = (Bt + 1) // 2
    while Lt > 128 and live_bytes(Bt, Lt) > budget:
        Lt = max(128, _round_up(Lt // 2, 128))

    n_l = pl.cdiv(L, Lt)
    n_b = pl.cdiv(B, Bt)

    live = live_bytes(Bt, Lt)
    vmem_limit = int(min(int(vmem_cap * 0.75), max(16 << 20, 2 * live)))

    # Advisory cost for XLA's scheduler: one read of x (Cb rows), one of pe,
    # one write of the output.
    cost = pl.CostEstimate(
        flops=B * E * L,
        transcendentals=0,
        bytes_accessed=B * Cb * L * x_itemsize + E * L * pe_itemsize + B * E * L * o_itemsize,
    )

    return pl.pallas_call(
        _pe_add_kernel,
        out_shape=jax.ShapeDtypeStruct((B, E, L), out_dtype),
        grid_spec=pltpu.PrefetchScalarGridSpec(
            num_scalar_prefetch=0,
            # Batch tiles innermost (fastest-varying): pe's block index is a
            # function of the L tile only, so its DMA is skipped across n_b.
            grid=(n_l, n_b),
            in_specs=[
                pl.BlockSpec((Bt, Cb, Lt), lambda l, b: (b, 0, l)),
                pl.BlockSpec((E, Lt), lambda l, b: (0, l)),
            ],
            out_specs=pl.BlockSpec((Bt, E, Lt), lambda l, b: (b, 0, l)),
        ),
        compiler_params=pltpu.CompilerParams(
            dimension_semantics=("parallel", "parallel"),
            vmem_limit_bytes=vmem_limit,
        ),
        cost_estimate=cost,
    )(x, pe)


if __name__ == "__main__":
    key = jax.random.PRNGKey(0)

    # Case 1: tiny module-style shapes (C > E, short seq) -> exercises the
    # small-shape XLA fallback path (kernel launch overhead would dominate).
    B1, C1, E1, L1 = 2, 12, 8, 16
    x1 = jax.random.normal(key, (B1, C1, L1), dtype=jnp.float32)
    pe1 = build_pe(E1, L1)
    out1 = jax.block_until_ready(positional_encoding_forward(x1, pe1))
    ref1 = x1[:, :E1, :] + pe1[None, :, :]
    assert out1.shape == (B1, E1, L1)
    assert jnp.allclose(out1, ref1, atol=1e-6), "mismatch vs reference (case 1)"

    # Case 2: module defaults (E=50, max_len=400, C == E) with a ragged last
    # L tile (400 % 128 != 0) -- forced through the Pallas path.
    B2, E2, L2 = 2, 50, 400
    k2 = jax.random.fold_in(key, 1)
    x2 = jax.random.normal(k2, (B2, E2, L2), dtype=jnp.float32)
    pe2 = build_pe(E2, L2)
    out2 = jax.block_until_ready(positional_encoding_forward(x2, pe2, force_pallas=True))
    ref2 = x2 + pe2[None, :, :]
    assert out2.shape == (B2, E2, L2)
    assert jnp.allclose(out2, ref2, atol=1e-6), "mismatch vs reference (case 2)"

    # Case 3: C > E with E % 8 != 0 (in-kernel channel slice), multiple L
    # tiles, batch folded into the block -- auto heuristic picks the kernel.
    B3, C3, E3, L3 = 3, 56, 50, 1024
    k3 = jax.random.fold_in(key, 2)
    x3 = jax.random.normal(k3, (B3, C3, L3), dtype=jnp.float32)
    pe3 = build_pe(E3, L3)
    out3 = jax.block_until_ready(positional_encoding_forward(x3, pe3))
    ref3 = x3[:, :E3, :] + pe3[None, :, :]
    assert out3.shape == (B3, E3, L3)
    assert jnp.allclose(out3, ref3, atol=1e-6), "mismatch vs reference (case 3)"

    # Case 4: C > E with E % 8 == 0 (narrow sublane block: unused channel rows
    # never DMA'd) -- forced through the Pallas path.
    B4, C4, E4, L4 = 2, 16, 8, 2048
    k4 = jax.random.fold_in(key, 3)
    x4 = jax.random.normal(k4, (B4, C4, L4), dtype=jnp.float32)
    pe4 = build_pe(E4, L4)
    out4 = jax.block_until_ready(positional_encoding_forward(x4, pe4, force_pallas=True))
    ref4 = x4[:, :E4, :] + pe4[None, :, :]
    assert out4.shape == (B4, E4, L4)
    assert jnp.allclose(out4, ref4, atol=1e-6), "mismatch vs reference (case 4)"

    print("KERNEL_OK")
</pallas_src>

<mosaic_0001>
module attributes {stable_mosaic.version = 11 : i64} {
  func.func @_pe_add_kernel(%arg0: i32, %arg1: i32, %arg2: memref<2x50x256xf32, #tpu.memory_space<vmem>>, %arg3: memref<50x256xf32, #tpu.memory_space<vmem>>, %arg4: memref<2x50x256xf32, #tpu.memory_space<vmem>>) attributes {dimension_semantics = [#tpu.dimension_semantics<parallel>, #tpu.dimension_semantics<parallel>], iteration_bounds = array<i64: 2, 1>, scalar_prefetch = 0 : i64, scratch_operands = 0 : i64, tpu.core_type = #tpu.core_type<tc>, window_params = [{transform_indices = @transform_0, window_bounds = array<i64: 2, 50, 256>}, {transform_indices = @transform_1, window_bounds = array<i64: 50, 256>}, {transform_indices = @transform_2, window_bounds = array<i64: 2, 50, 256>}]} {
    %c0 = arith.constant 0 : index
    %c0_0 = arith.constant 0 : index
    %c0_1 = arith.constant 0 : index
    %0 = vector.load %arg2[%c0, %c0_0, %c0_1] : memref<2x50x256xf32, #tpu.memory_space<vmem>>, vector<2x50x256xf32>
    %c0_2 = arith.constant 0 : index
    %c0_3 = arith.constant 0 : index
    %1 = vector.load %arg3[%c0_2, %c0_3] : memref<50x256xf32, #tpu.memory_space<vmem>>, vector<50x256xf32>
    %2 = vector.shape_cast %1 : vector<50x256xf32> to vector<1x50x256xf32>
    %3 = vector.broadcast %2 : vector<1x50x256xf32> to vector<2x50x256xf32>
    %4 = arith.addf %0, %3 : vector<2x50x256xf32>
    %c0_4 = arith.constant 0 : index
    %c0_5 = arith.constant 0 : index
    %c0_6 = arith.constant 0 : index
    %5 = vector.load %arg4[%c0_4, %c0_5, %c0_6] : memref<2x50x256xf32, #tpu.memory_space<vmem>>, vector<2x50x256xf32>
    tpu.vector_store %arg4[%c0_4, %c0_5, %c0_6], %4 {strides = array<i32>} : memref<2x50x256xf32, #tpu.memory_space<vmem>>, vector<2x50x256xf32>,
    return
  }
  func.func @transform_0(%arg0: i32, %arg1: i32) -> (i32, i32, i32) {
    %c0_i32 = arith.constant 0 : i32
    %c0_i32_0 = arith.constant 0 : i32
    return %arg1, %c0_i32, %arg0 : i32, i32, i32
  }
  func.func @transform_1(%arg0: i32, %arg1: i32) -> (i32, i32) {
    %c0_i32 = arith.constant 0 : i32
    %c0_i32_0 = arith.constant 0 : i32
    return %c0_i32, %arg0 : i32, i32
  }
  func.func @transform_2(%arg0: i32, %arg1: i32) -> (i32, i32, i32) {
    %c0_i32 = arith.constant 0 : i32
    %c0_i32_0 = arith.constant 0 : i32
    return %arg1, %c0_i32, %arg0 : i32, i32, i32
  }
}

</mosaic_0001>

<llo_original>
// kernel: tpu_custom_call.1
$region0: #{tpu_custom_call.1}
  #allocation0 [shape = 'u32[]', space=smem, size = 0x4, offset = 0x4, fixed_abs, tag = 'smem constant byte address 0x4 - core index']
  #allocation1 [shape = 'u32[72,128]{1,0:T(1,128)}', space=vmem, size = 0x9000, scoped, tag = 'internal scratch']
  %s0 = inlined_call_operand.vmem [shape: f32[2,50,400], index: 0, kind: input, shape index: {}]
  %s1 = inlined_call_operand.vmem [shape: f32[50,400], index: 1, kind: input, shape index: {}]
  %s2 = inlined_call_operand.vmem [shape: f32[2,50,400], index: 2, kind: output, shape index: {}]
  %s3 = sld [smem:[#allocation0]]
  $region106: #{tpu_custom_call.1} parent=0
    _
  %s5 = ssub.s32 1, %s3
  %s6 = scalar_select 0, %s5, %s3
  $region1: #{tpu_custom_call.1} parent=0
    #allocation2 [shape = 'u8[229376]{0}', space=vmem, size = 0x38000, scoped, tag = 'input window, operand 0']
    #allocation3 [shape = 'u8[114688]{0}', space=vmem, size = 0x1c000, scoped, tag = 'input window, operand 1']
    #allocation4 [shape = 'u8[229376]{0}', space=vmem, size = 0x38000, scoped, tag = 'output window, operand 0']
    loop: start=0, step=1, limit=4
    $region2: #{tpu_custom_call.1} parent=1 // loop_pre_header
      _
    $region3: #{tpu_custom_call.1} parent=1 // loop_header
      %s8 = sphi 0, %s12
      %p9 = scmp.ge.s32.totalorder %s8, 4
      %s15 = sphi 0, %s27
      %s16 = sphi 0, %s23
      %s17 = sphi 0, %s15
      %s18 = sphi 0, %s16
      %s19 = sphi 0, %s17
      %s20 = sphi 0, %s18
      %s32 = sphi 0, %s34
      %s35 = sphi 0, %s32
      %s36 = sphi 0, %s35
      %s52 = sphi 0, %s36
      %s58 = sphi 0, %s60
      %s61 = sphi 0, %s58
      %s62 = sphi 0, %s61
      %s78 = sphi 0, %s62
      %s86 = sphi 0, %s88
      %s89 = sphi 0, %s86
      %s90 = sphi 0, %s89
      %s106 = sphi 0, %s90
    $region4: #{tpu_custom_call.1} parent=1 // loop_header_branch
      %11 = sbr.rel (%p9) target = $region8
    $region5: #{tpu_custom_call.1} parent=1 // loop_body
      %s13 = ssub.s32 %s8, 1
      %s14 = ssub.s32 %s8, 2
      %s21 = sadd.s32 1, %s16
      %p22 = scmp.ge.s32.totalorder %s21, 1
      %s23 = scalar_select %p22, 0, %s21
      %s24 = sadd.s32 1, %s15
      %s25 = scalar_select %p22, %s24, %s15
      %p26 = scmp.ge.s32.totalorder %s25, 2
      %s27 = scalar_select %p26, 0, %s25
      %s28 = ssub.s32 %s16, %s23
      %s29 = ssub.s32 %s15, %s27
      %s30 = sor.u32 %s28, %s29
      %p31 = scmp.eq.s32.totalorder %s30, 0
      %s33 = sadd.s32 %s32, 1
      %s34 = scalar_select %p31, %s32, %s33
      %p37 = pneg %p31
      %p38 = scmp.eq.s32.totalorder %s8, 1
      %p39 = por %p37, %p38
      %p40 = scmp.ne.s32.totalorder %s32, %s35
      %p41 = scmp.eq.s32.totalorder %s8, 0
      %p42 = por %p40, %p41
      %p43 = scmp.ne.s32.totalorder %s32, %s35
      %p44 = scmp.eq.s32.totalorder %s13, 1
      %p45 = por %p43, %p44
      %p46 = scmp.ne.s32.totalorder %s35, %s36
      %p47 = scmp.eq.s32.totalorder %s13, 0
      %p48 = por %p46, %p47
      %p49 = scmp.ne.s32.totalorder %s35, %s36
      %p50 = scmp.eq.s32.totalorder %s14, 1
      %p51 = por %p49, %p50
      %p53 = scmp.ne.s32.totalorder %s36, %s52
      %p54 = scmp.eq.s32.totalorder %s14, 0
      %p55 = por %p53, %p54
      %s56 = ssub.s32 %s15, %s27
      %p57 = scmp.eq.s32.totalorder %s56, 0
      %s59 = sadd.s32 %s58, 1
      %s60 = scalar_select %p57, %s58, %s59
      %p63 = pneg %p57
      %p64 = scmp.eq.s32.totalorder %s8, 1
      %p65 = por %p63, %p64
      %p66 = scmp.ne.s32.totalorder %s58, %s61
      %p67 = scmp.eq.s32.totalorder %s8, 0
      %p68 = por %p66, %p67
      %p69 = scmp.ne.s32.totalorder %s58, %s61
      %p70 = scmp.eq.s32.totalorder %s13, 1
      %p71 = por %p69, %p70
      %p72 = scmp.ne.s32.totalorder %s61, %s62
      %p73 = scmp.eq.s32.totalorder %s13, 0
      %p74 = por %p72, %p73
      %p75 = scmp.ne.s32.totalorder %s61, %s62
      %p76 = scmp.eq.s32.totalorder %s14, 1
      %p77 = por %p75, %p76
      %p79 = scmp.ne.s32.totalorder %s62, %s78
      %p80 = scmp.eq.s32.totalorder %s14, 0
      %p81 = por %p79, %p80
      %s82 = ssub.s32 %s16, %s23
      %s83 = ssub.s32 %s15, %s27
      %s84 = sor.u32 %s82, %s83
      %p85 = scmp.eq.s32.totalorder %s84, 0
      %s87 = sadd.s32 %s86, 1
      %s88 = scalar_select %p85, %s86, %s87
      %p91 = pneg %p85
      %p92 = scmp.eq.s32.totalorder %s8, 1
      %p93 = por %p91, %p92
      %p94 = scmp.ne.s32.totalorder %s86, %s89
      %p95 = scmp.eq.s32.totalorder %s8, 0
      %p96 = por %p94, %p95
      %p97 = scmp.ne.s32.totalorder %s86, %s89
      %p98 = scmp.eq.s32.totalorder %s13, 1
      %p99 = por %p97, %p98
      %p100 = scmp.ne.s32.totalorder %s89, %s90
      %p101 = scmp.eq.s32.totalorder %s13, 0
      %p102 = por %p100, %p101
      %p103 = scmp.ne.s32.totalorder %s89, %s90
      %p104 = scmp.eq.s32.totalorder %s14, 1
      %p105 = por %p103, %p104
      %p107 = scmp.ne.s32.totalorder %s90, %s106
      %p108 = scmp.eq.s32.totalorder %s14, 0
      %p109 = por %p107, %p108
      %p110 = scmp.le.s32.totalorder 1, %s8
      %p111 = scmp.lt.s32.totalorder %s8, 3
      %p112 = pnand %p110, %p111
      %p113 = pneg %p112
      // Predicated region
      $region9: #{tpu_custom_call.1} parent=5 // pred_check
        _
      $region10: #{tpu_custom_call.1} parent=5 // pred_check_branch
        %115 = sbr.rel (%p112) target = $region12
      $region11: #{tpu_custom_call.1} parent=5 // pred_region
        %s116 = ssub.s32 %s8, 1
      $region12: #{tpu_custom_call.1} parent=5 // pred_fallthru
        _
      %p117 = scmp.lt.s32.totalorder %s8, 2
      // Predicated region
      $region13: #{tpu_custom_call.1} parent=5 // pred_check
        %p118 = pneg %p117
      $region14: #{tpu_custom_call.1} parent=5 // pred_check_branch
        %120 = sbr.rel (%p118) target = $region16
      $region15: #{tpu_custom_call.1} parent=5 // pred_region
        // Predicated region
        $region17: #{tpu_custom_call.1} parent=15 // pred_check
          %p121 = pneg %p42
        $region18: #{tpu_custom_call.1} parent=15 // pred_check_branch
          %123 = sbr.rel (%p121) target = $region20
        $region19: #{tpu_custom_call.1} parent=15 // pred_region
          %s124 = sand.u32 %s32, 1
          %s125 = sand.u32 %s32, 1
          %s126 = smul.addr %s125, 224
          %s127 = scalar_lea.vmem [#allocation2], %s126
          %s128 = smul.u32 2, %s16
          %s129 = smul.u32 2, %s15
          %s130 = smul.addr %s128, 28
          %s131 = sadd.s32 %s129, %s130
          %s132 = smul.addr %s131, 8
          %s133 = scalar_lea.vmem %s0, %s132
          // Predicated region
          $region21: #{tpu_custom_call.1} parent=19 // pred_check
            _
          $region22: #{tpu_custom_call.1} parent=19 // pred_check_branch
            %135 = sbr.rel (0) target = $region24
          $region23: #{tpu_custom_call.1} parent=19 // pred_region
            // Predicated region
            $region25: #{tpu_custom_call.1} parent=23 // pred_check
              _
            $region26: #{tpu_custom_call.1} parent=23 // pred_check_branch
              %137 = sbr.rel (0) target = $region28
            $region27: #{tpu_custom_call.1} parent=23 // pred_region
              loop: start=0, step=1, limit=1
              $region29: #{tpu_custom_call.1} parent=27 // loop_pre_header
                _
              $region30: #{tpu_custom_call.1} parent=27 // loop_header
                %s139 = sphi 0, %s143
                %p140 = scmp.ge.s32.totalorder %s139, 1
                %s144 = sphi %s133, %s133
                %s145 = sphi %s127, %s127
              $region31: #{tpu_custom_call.1} parent=27 // loop_header_branch
                %142 = sbr.rel (%p140) target = $region35
              $region32: #{tpu_custom_call.1} parent=27 // loop_body
                %v146 = vld [vmem:[%s144] sm:$0xff]
                %147 = vst [vmem:[%s145] sm:$0xff] %v146
                %v148 = vld [vmem:[%s144 + $0x8] sm:$0xff]
                %149 = vst [vmem:[%s145 + $0x8] sm:$0xff] %v148
                %v150 = vld [vmem:[%s144 + $0x20] sm:$0xff]
                %151 = vst [vmem:[%s145 + $0x10] sm:$0xff] %v150
                %v152 = vld [vmem:[%s144 + $0x28] sm:$0xff]
                %153 = vst [vmem:[%s145 + $0x18] sm:$0xff] %v152
                %v154 = vld [vmem:[%s144 + $0x40] sm:$0xff]
                %155 = vst [vmem:[%s145 + $0x20] sm:$0xff] %v154
                %v156 = vld [vmem:[%s144 + $0x48] sm:$0xff]
                %157 = vst [vmem:[%s145 + $0x28] sm:$0xff] %v156
                %v158 = vld [vmem:[%s144 + $0x60] sm:$0xff]
                %159 = vst [vmem:[%s145 + $0x30] sm:$0xff] %v158
                %v160 = vld [vmem:[%s144 + $0x68] sm:$0xff]
                %161 = vst [vmem:[%s145 + $0x38] sm:$0xff] %v160
                %v162 = vld [vmem:[%s144 + $0x80] sm:$0xff]
                %163 = vst [vmem:[%s145 + $0x40] sm:$0xff] %v162
                %v164 = vld [vmem:[%s144 + $0x88] sm:$0xff]
                %165 = vst [vmem:[%s145 + $0x48] sm:$0xff] %v164
                %v166 = vld [vmem:[%s144 + $0xa0] sm:$0xff]
                %167 = vst [vmem:[%s145 + $0x50] sm:$0xff] %v166
                %v168 = vld [vmem:[%s144 + $0xa8] sm:$0xff]
                %169 = vst [vmem:[%s145 + $0x58] sm:$0xff] %v168
                %v170 = vld [vmem:[%s144 + $0xc0] sm:$0xff]
                %171 = vst [vmem:[%s145 + $0x60] sm:$0xff] %v170
                %v172 = vld [vmem:[%s144 + $0xc8] sm:$0xff]
                %173 = vst [vmem:[%s145 + $0x68] sm:$0xff] %v172
                %v174 = vld [vmem:[%s144 + $0xe0] sm:$0xff]
                %175 = vst [vmem:[%s145 + $0x70] sm:$0xff] %v174
                %v176 = vld [vmem:[%s144 + $0xe8] sm:$0xff]
                %177 = vst [vmem:[%s145 + $0x78] sm:$0xff] %v176
                %v178 = vld [vmem:[%s144 + $0x100] sm:$0xff]
                %179 = vst [vmem:[%s145 + $0x80] sm:$0xff] %v178
                %v180 = vld [vmem:[%s144 + $0x108] sm:$0xff]
                %181 = vst [vmem:[%s145 + $0x88] sm:$0xff] %v180
                %v182 = vld [vmem:[%s144 + $0x120] sm:$0xff]
                %183 = vst [vmem:[%s145 + $0x90] sm:$0xff] %v182
                %v184 = vld [vmem:[%s144 + $0x128] sm:$0xff]
                %185 = vst [vmem:[%s145 + $0x98] sm:$0xff] %v184
                %v186 = vld [vmem:[%s144 + $0x140] sm:$0xff]
                %187 = vst [vmem:[%s145 + $0xa0] sm:$0xff] %v186
                %v188 = vld [vmem:[%s144 + $0x148] sm:$0xff]
                %189 = vst [vmem:[%s145 + $0xa8] sm:$0xff] %v188
                %v190 = vld [vmem:[%s144 + $0x160] sm:$0xff]
                %191 = vst [vmem:[%s145 + $0xb0] sm:$0xff] %v190
                %v192 = vld [vmem:[%s144 + $0x168] sm:$0xff]
                %193 = vst [vmem:[%s145 + $0xb8] sm:$0xff] %v192
                %v194 = vld [vmem:[%s144 + $0x180] sm:$0xff]
                %195 = vst [vmem:[%s145 + $0xc0] sm:$0xff] %v194
                %v196 = vld [vmem:[%s144 + $0x188] sm:$0xff]
                %197 = vst [vmem:[%s145 + $0xc8] sm:$0xff] %v196
                %v198 = vld [vmem:[%s144 + $0x1a0] sm:$0xff]
                %199 = vst [vmem:[%s145 + $0xd0] sm:$0xff] %v198
                %v200 = vld [vmem:[%s144 + $0x1a8] sm:$0xff]
                %201 = vst [vmem:[%s145 + $0xd8] sm:$0xff] %v200
              $region33: #{tpu_custom_call.1} parent=27 // loop_footer
                %s143 = sadd.s32 1, %s139
              $region34: #{tpu_custom_call.1} parent=27 // loop_footer_branch
                %138 = sbr.rel target = $region30
              $region35: #{tpu_custom_call.1} parent=27 // loop_exit
                _
            $region28: #{tpu_custom_call.1} parent=23 // pred_fallthru
              _
            // Predicated region
            $region36: #{tpu_custom_call.1} parent=23 // pred_check
              _
            $region37: #{tpu_custom_call.1} parent=23 // pred_check_branch
              %203 = sbr.rel target = $region39
            $region38: #{tpu_custom_call.1} parent=23 // pred_region
              _
            $region39: #{tpu_custom_call.1} parent=23 // pred_fallthru
              _
          $region24: #{tpu_custom_call.1} parent=19 // pred_fallthru
            _
          %204 = vnop
        $region20: #{tpu_custom_call.1} parent=15 // pred_fallthru
          _
        // Predicated region
        $region40: #{tpu_custom_call.1} parent=15 // pred_check
          %p205 = pneg %p68
        $region41: #{tpu_custom_call.1} parent=15 // pred_check_branch
          %207 = sbr.rel (%p205) target = $region43
        $region42: #{tpu_custom_call.1} parent=15 // pred_region
          %s208 = sand.u32 %s58, 1
          %s209 = sand.u32 %s58, 1
          %s210 = smul.addr %s209, 112
          %s211 = scalar_lea.vmem [#allocation3], %s210
          %s212 = smul.u32 2, %s15
          %s213 = smul.addr %s212, 8
          %s214 = scalar_lea.vmem %s1, %s213
          // Predicated region
          $region44: #{tpu_custom_call.1} parent=42 // pred_check
            _
          $region45: #{tpu_custom_call.1} parent=42 // pred_check_branch
            %216 = sbr.rel (0) target = $region47
          $region46: #{tpu_custom_call.1} parent=42 // pred_region
            // Predicated region
            $region48: #{tpu_custom_call.1} parent=46 // pred_check
              _
            $region49: #{tpu_custom_call.1} parent=46 // pred_check_branch
              %218 = sbr.rel (0) target = $region51
            $region50: #{tpu_custom_call.1} parent=46 // pred_region
              loop: start=0, step=1, limit=1
              $region52: #{tpu_custom_call.1} parent=50 // loop_pre_header
                _
              $region53: #{tpu_custom_call.1} parent=50 // loop_header
                %s220 = sphi 0, %s224
                %p221 = scmp.ge.s32.totalorder %s220, 1
                %s225 = sphi %s214, %s214
                %s226 = sphi %s211, %s211
              $region54: #{tpu_custom_call.1} parent=50 // loop_header_branch
                %223 = sbr.rel (%p221) target = $region58
              $region55: #{tpu_custom_call.1} parent=50 // loop_body
                %v227 = vld [vmem:[%s225] sm:$0xff]
                %228 = vst [vmem:[%s226] sm:$0xff] %v227
                %v229 = vld [vmem:[%s225 + $0x8] sm:$0xff]
                %230 = vst [vmem:[%s226 + $0x8] sm:$0xff] %v229
                %v231 = vld [vmem:[%s225 + $0x20] sm:$0xff]
                %232 = vst [vmem:[%s226 + $0x10] sm:$0xff] %v231
                %v233 = vld [vmem:[%s225 + $0x28] sm:$0xff]
                %234 = vst [vmem:[%s226 + $0x18] sm:$0xff] %v233
                %v235 = vld [vmem:[%s225 + $0x40] sm:$0xff]
                %236 = vst [vmem:[%s226 + $0x20] sm:$0xff] %v235
                %v237 = vld [vmem:[%s225 + $0x48] sm:$0xff]
                %238 = vst [vmem:[%s226 + $0x28] sm:$0xff] %v237
                %v239 = vld [vmem:[%s225 + $0x60] sm:$0xff]
                %240 = vst [vmem:[%s226 + $0x30] sm:$0xff] %v239
                %v241 = vld [vmem:[%s225 + $0x68] sm:$0xff]
                %242 = vst [vmem:[%s226 + $0x38] sm:$0xff] %v241
                %v243 = vld [vmem:[%s225 + $0x80] sm:$0xff]
                %244 = vst [vmem:[%s226 + $0x40] sm:$0xff] %v243
                %v245 = vld [vmem:[%s225 + $0x88] sm:$0xff]
                %246 = vst [vmem:[%s226 + $0x48] sm:$0xff] %v245
                %v247 = vld [vmem:[%s225 + $0xa0] sm:$0xff]
                %248 = vst [vmem:[%s226 + $0x50] sm:$0xff] %v247
                %v249 = vld [vmem:[%s225 + $0xa8] sm:$0xff]
                %250 = vst [vmem:[%s226 + $0x58] sm:$0xff] %v249
                %v251 = vld [vmem:[%s225 + $0xc0] sm:$0xff]
                %252 = vst [vmem:[%s226 + $0x60] sm:$0xff] %v251
                %v253 = vld [vmem:[%s225 + $0xc8] sm:$0xff]
                %254 = vst [vmem:[%s226 + $0x68] sm:$0xff] %v253
              $region56: #{tpu_custom_call.1} parent=50 // loop_footer
                %s224 = sadd.s32 1, %s220
              $region57: #{tpu_custom_call.1} parent=50 // loop_footer_branch
                %219 = sbr.rel target = $region53
              $region58: #{tpu_custom_call.1} parent=50 // loop_exit
                _
            $region51: #{tpu_custom_call.1} parent=46 // pred_fallthru
              _
            // Predicated region
            $region59: #{tpu_custom_call.1} parent=46 // pred_check
              _
            $region60: #{tpu_custom_call.1} parent=46 // pred_check_branch
              %256 = sbr.rel target = $region62
            $region61: #{tpu_custom_call.1} parent=46 // pred_region
              _
            $region62: #{tpu_custom_call.1} parent=46 // pred_fallthru
              _
          $region47: #{tpu_custom_call.1} parent=42 // pred_fallthru
            _
          %257 = vnop
        $region43: #{tpu_custom_call.1} parent=15 // pred_fallthru
          _
      $region16: #{tpu_custom_call.1} parent=5 // pred_fallthru
        _
      %p258 = scmp.le.s32.totalorder 1, %s8
      %p259 = scmp.lt.s32.totalorder %s8, 3
      %p260 = pnand %p258, %p259
      %p261 = pneg %p260
      // Predicated region
      $region63: #{tpu_custom_call.1} parent=5 // pred_check
        _
      $region64: #{tpu_custom_call.1} parent=5 // pred_check_branch
        %263 = sbr.rel (%p260) target = $region66
      $region65: #{tpu_custom_call.1} parent=5 // pred_region
        %s264 = ssub.s32 %s8, 1
        %s265 = sand.u32 %s35, 1
        %s266 = sand.u32 %s35, 1
        %s267 = smul.addr %s266, 224
        %s268 = scalar_lea.vmem [#allocation2], %s267
        // Predicated region
        $region67: #{tpu_custom_call.1} parent=65 // pred_check
          %p269 = pneg %p48
        $region68: #{tpu_custom_call.1} parent=65 // pred_check_branch
          %271 = sbr.rel (%p269) target = $region70
        $region69: #{tpu_custom_call.1} parent=65 // pred_region
          _
        $region70: #{tpu_custom_call.1} parent=65 // pred_fallthru
          _
        %s272 = sand.u32 %s61, 1
        %s273 = sand.u32 %s61, 1
        %s274 = smul.addr %s273, 112
        %s275 = scalar_lea.vmem [#allocation3], %s274
        // Predicated region
        $region71: #{tpu_custom_call.1} parent=65 // pred_check
          %p276 = pneg %p74
        $region72: #{tpu_custom_call.1} parent=65 // pred_check_branch
          %278 = sbr.rel (%p276) target = $region74
        $region73: #{tpu_custom_call.1} parent=65 // pred_region
          _
        $region74: #{tpu_custom_call.1} parent=65 // pred_fallthru
          _
        %s279 = sand.u32 %s35, 1
        %s280 = sand.u32 %s35, 1
        %s281 = smul.addr %s280, 224
        %s282 = scalar_lea.vmem [#allocation2], %s281
        %p283 = pneg %p48
        %p284 = pneg %p45
        %s285 = sand.u32 %s61, 1
        %s286 = sand.u32 %s61, 1
        %s287 = smul.addr %s286, 112
        %s288 = scalar_lea.vmem [#allocation3], %s287
        %p289 = pneg %p74
        %p290 = pneg %p71
        %p291 = pneg %p102
        %p292 = pneg %p99
        %s293 = sand.u32 %s89, 1
        %s294 = sand.u32 %s89, 1
        %s295 = smul.addr %s294, 224
        %s296 = scalar_lea.vmem [#allocation4], %s295
        %s297 = smul.u32 2, %s18
        %s298 = smul.u32 2, %s17
        %s299 = smul.u32 2, %s17
        %s300 = smul.u32 2, %s18
        %s301 = smul.u32 2, %s17
        %v302 = vld [vmem:[%s268] sm:$0xff]
        %v303 = vld [vmem:[%s268 + $0x8] sm:$0xff]
        %v304 = vld [vmem:[%s268 + $0x10] sm:$0xff]
        %v305 = vld [vmem:[%s268 + $0x18] sm:$0xff]
        %v306 = vld [vmem:[%s268 + $0x20] sm:$0xff]
        %v307 = vld [vmem:[%s268 + $0x28] sm:$0xff]
        %v308 = vld [vmem:[%s268 + $0x30] sm:$0xff]
        %v309 = vld [vmem:[%s268 + $0x38] sm:$0xff]
        %v310 = vld [vmem:[%s268 + $0x40] sm:$0xff]
        %v311 = vld [vmem:[%s268 + $0x48] sm:$0xff]
        %v312 = vld [vmem:[%s268 + $0x50] sm:$0xff]
        %v313 = vld [vmem:[%s268 + $0x58] sm:$0xff]
        %v314 = vld [vmem:[%s268 + $0x60] sm:$0x3]
        %v315 = vld [vmem:[%s268 + $0x68] sm:$0x3]
        %v316 = vld [vmem:[%s268 + $0x70] sm:$0xff]
        %v317 = vld [vmem:[%s268 + $0x78] sm:$0xff]
        %v318 = vld [vmem:[%s268 + $0x80] sm:$0xff]
        %v319 = vld [vmem:[%s268 + $0x88] sm:$0xff]
        %v320 = vld [vmem:[%s268 + $0x90] sm:$0xff]
        %v321 = vld [vmem:[%s268 + $0x98] sm:$0xff]
        %v322 = vld [vmem:[%s268 + $0xa0] sm:$0xff]
        %v323 = vld [vmem:[%s268 + $0xa8] sm:$0xff]
        %v324 = vld [vmem:[%s268 + $0xb0] sm:$0xff]
        %v325 = vld [vmem:[%s268 + $0xb8] sm:$0xff]
        %v326 = vld [vmem:[%s268 + $0xc0] sm:$0xff]
        %v327 = vld [vmem:[%s268 + $0xc8] sm:$0xff]
        %v328 = vld [vmem:[%s268 + $0xd0] sm:$0x3]
        %v329 = vld [vmem:[%s268 + $0xd8] sm:$0x3]
        %v330 = vld [vmem:[%s275] sm:$0xff]
        %v331 = vld [vmem:[%s275 + $0x8] sm:$0xff]
        %v332 = vld [vmem:[%s275 + $0x10] sm:$0xff]
        %v333 = vld [vmem:[%s275 + $0x18] sm:$0xff]
        %v334 = vld [vmem:[%s275 + $0x20] sm:$0xff]
        %v335 = vld [vmem:[%s275 + $0x28] sm:$0xff]
        %v336 = vld [vmem:[%s275 + $0x30] sm:$0xff]
        %v337 = vld [vmem:[%s275 + $0x38] sm:$0xff]
        %v338 = vld [vmem:[%s275 + $0x40] sm:$0xff]
        %v339 = vld [vmem:[%s275 + $0x48] sm:$0xff]
        %v340 = vld [vmem:[%s275 + $0x50] sm:$0xff]
        %v341 = vld [vmem:[%s275 + $0x58] sm:$0xff]
        %v342 = vld [vmem:[%s275 + $0x60] sm:$0x3]
        %v343 = vld [vmem:[%s275 + $0x68] sm:$0x3]
        %v344 = vadd.f32 %v302, %v330
        %v345 = vadd.f32 %v303, %v331
        %v346 = vadd.f32 %v304, %v332
        %v347 = vadd.f32 %v305, %v333
        %v348 = vadd.f32 %v306, %v334
        %v349 = vadd.f32 %v307, %v335
        %v350 = vadd.f32 %v308, %v336
        %v351 = vadd.f32 %v309, %v337
        %v352 = vadd.f32 %v310, %v338
        %v353 = vadd.f32 %v311, %v339
        %v354 = vadd.f32 %v312, %v340
        %v355 = vadd.f32 %v313, %v341
        %v356 = vadd.f32 %v314, %v342
        %v357 = vadd.f32 %v315, %v343
        %v358 = vadd.f32 %v316, %v330
        %v359 = vadd.f32 %v317, %v331
        %v360 = vadd.f32 %v318, %v332
        %v361 = vadd.f32 %v319, %v333
        %v362 = vadd.f32 %v320, %v334
        %v363 = vadd.f32 %v321, %v335
        %v364 = vadd.f32 %v322, %v336
        %v365 = vadd.f32 %v323, %v337
        %v366 = vadd.f32 %v324, %v338
        %v367 = vadd.f32 %v325, %v339
        %v368 = vadd.f32 %v326, %v340
        %v369 = vadd.f32 %v327, %v341
        %v370 = vadd.f32 %v328, %v342
        %v371 = vadd.f32 %v329, %v343
        %372 = vst [vmem:[%s296] sm:$0xff] %v344
        %373 = vst [vmem:[%s296 + $0x8] sm:$0xff] %v345
        %374 = vst [vmem:[%s296 + $0x10] sm:$0xff] %v346
        %375 = vst [vmem:[%s296 + $0x18] sm:$0xff] %v347
        %376 = vst [vmem:[%s296 + $0x20] sm:$0xff] %v348
        %377 = vst [vmem:[%s296 + $0x28] sm:$0xff] %v349
        %378 = vst [vmem:[%s296 + $0x30] sm:$0xff] %v350
        %379 = vst [vmem:[%s296 + $0x38] sm:$0xff] %v351
        %380 = vst [vmem:[%s296 + $0x40] sm:$0xff] %v352
        %381 = vst [vmem:[%s296 + $0x48] sm:$0xff] %v353
        %382 = vst [vmem:[%s296 + $0x50] sm:$0xff] %v354
        %383 = vst [vmem:[%s296 + $0x58] sm:$0xff] %v355
        %384 = vst [vmem:[%s296 + $0x60] sm:$0x3] %v356
        %385 = vst [vmem:[%s296 + $0x68] sm:$0x3] %v357
        %386 = vst [vmem:[%s296 + $0x70] sm:$0xff] %v358
        %387 = vst [vmem:[%s296 + $0x78] sm:$0xff] %v359
        %388 = vst [vmem:[%s296 + $0x80] sm:$0xff] %v360
        %389 = vst [vmem:[%s296 + $0x88] sm:$0xff] %v361
        %390 = vst [vmem:[%s296 + $0x90] sm:$0xff] %v362
        %391 = vst [vmem:[%s296 + $0x98] sm:$0xff] %v363
        %392 = vst [vmem:[%s296 + $0xa0] sm:$0xff] %v364
        %393 = vst [vmem:[%s296 + $0xa8] sm:$0xff] %v365
        %394 = vst [vmem:[%s296 + $0xb0] sm:$0xff] %v366
        %395 = vst [vmem:[%s296 + $0xb8] sm:$0xff] %v367
        %396 = vst [vmem:[%s296 + $0xc0] sm:$0xff] %v368
        %397 = vst [vmem:[%s296 + $0xc8] sm:$0xff] %v369
        %398 = vst [vmem:[%s296 + $0xd0] sm:$0x3] %v370
        %399 = vst [vmem:[%s296 + $0xd8] sm:$0x3] %v371
        %s400 = sand.u32 %s89, 1
        %s401 = sand.u32 %s89, 1
        %s402 = smul.addr %s401, 224
        %s403 = scalar_lea.vmem [#allocation4], %s402
        // Predicated region
        $region75: #{tpu_custom_call.1} parent=65 // pred_check
          %p404 = pneg %p99
        $region76: #{tpu_custom_call.1} parent=65 // pred_check_branch
          %406 = sbr.rel (%p404) target = $region78
        $region77: #{tpu_custom_call.1} parent=65 // pred_region
          %s407 = smul.u32 2, %s18
          %s408 = smul.u32 2, %s17
          %s409 = smul.addr %s407, 28
          %s410 = sadd.s32 %s408, %s409
          %s411 = smul.addr %s410, 8
          %s412 = scalar_lea.vmem %s2, %s411
          // Predicated region
          $region79: #{tpu_custom_call.1} parent=77 // pred_check
            _
          $region80: #{tpu_custom_call.1} parent=77 // pred_check_branch
            %414 = sbr.rel (0) target = $region82
          $region81: #{tpu_custom_call.1} parent=77 // pred_region
            // Predicated region
            $region83: #{tpu_custom_call.1} parent=81 // pred_check
              _
            $region84: #{tpu_custom_call.1} parent=81 // pred_check_branch
              %416 = sbr.rel (0) target = $region86
            $region85: #{tpu_custom_call.1} parent=81 // pred_region
              loop: start=0, step=1, limit=1
              $region87: #{tpu_custom_call.1} parent=85 // loop_pre_header
                _
              $region88: #{tpu_custom_call.1} parent=85 // loop_header
                %s418 = sphi 0, %s422
                %p419 = scmp.ge.s32.totalorder %s418, 1
                %s423 = sphi %s403, %s403
                %s424 = sphi %s412, %s412
              $region89: #{tpu_custom_call.1} parent=85 // loop_header_branch
                %421 = sbr.rel (%p419) target = $region93
              $region90: #{tpu_custom_call.1} parent=85 // loop_body
                %v425 = vld [vmem:[%s423] sm:$0xff]
                %426 = vst [vmem:[%s424] sm:$0xff] %v425
                %v427 = vld [vmem:[%s423 + $0x8] sm:$0xff]
                %428 = vst [vmem:[%s424 + $0x8] sm:$0xff] %v427
                %v429 = vld [vmem:[%s423 + $0x10] sm:$0xff]
                %430 = vst [vmem:[%s424 + $0x20] sm:$0xff] %v429
                %v431 = vld [vmem:[%s423 + $0x18] sm:$0xff]
                %432 = vst [vmem:[%s424 + $0x28] sm:$0xff] %v431
                %v433 = vld [vmem:[%s423 + $0x20] sm:$0xff]
                %434 = vst [vmem:[%s424 + $0x40] sm:$0xff] %v433
                %v435 = vld [vmem:[%s423 + $0x28] sm:$0xff]
                %436 = vst [vmem:[%s424 + $0x48] sm:$0xff] %v435
                %v437 = vld [vmem:[%s423 + $0x30] sm:$0xff]
                %438 = vst [vmem:[%s424 + $0x60] sm:$0xff] %v437
                %v439 = vld [vmem:[%s423 + $0x38] sm:$0xff]
                %440 = vst [vmem:[%s424 + $0x68] sm:$0xff] %v439
                %v441 = vld [vmem:[%s423 + $0x40] sm:$0xff]
                %442 = vst [vmem:[%s424 + $0x80] sm:$0xff] %v441
                %v443 = vld [vmem:[%s423 + $0x48] sm:$0xff]
                %444 = vst [vmem:[%s424 + $0x88] sm:$0xff] %v443
                %v445 = vld [vmem:[%s423 + $0x50] sm:$0xff]
                %446 = vst [vmem:[%s424 + $0xa0] sm:$0xff] %v445
                %v447 = vld [vmem:[%s423 + $0x58] sm:$0xff]
                %448 = vst [vmem:[%s424 + $0xa8] sm:$0xff] %v447
                %v449 = vld [vmem:[%s423 + $0x60] sm:$0xff]
                %450 = vst [vmem:[%s424 + $0xc0] sm:$0xff] %v449
                %v451 = vld [vmem:[%s423 + $0x68] sm:$0xff]
                %452 = vst [vmem:[%s424 + $0xc8] sm:$0xff] %v451
                %v453 = vld [vmem:[%s423 + $0x70] sm:$0xff]
                %454 = vst [vmem:[%s424 + $0xe0] sm:$0xff] %v453
                %v455 = vld [vmem:[%s423 + $0x78] sm:$0xff]
                %456 = vst [vmem:[%s424 + $0xe8] sm:$0xff] %v455
                %v457 = vld [vmem:[%s423 + $0x80] sm:$0xff]
                %458 = vst [vmem:[%s424 + $0x100] sm:$0xff] %v457
                %v459 = vld [vmem:[%s423 + $0x88] sm:$0xff]
                %460 = vst [vmem:[%s424 + $0x108] sm:$0xff] %v459
                %v461 = vld [vmem:[%s423 + $0x90] sm:$0xff]
                %462 = vst [vmem:[%s424 + $0x120] sm:$0xff] %v461
                %v463 = vld [vmem:[%s423 + $0x98] sm:$0xff]
                %464 = vst [vmem:[%s424 + $0x128] sm:$0xff] %v463
                %v465 = vld [vmem:[%s423 + $0xa0] sm:$0xff]
                %466 = vst [vmem:[%s424 + $0x140] sm:$0xff] %v465
                %v467 = vld [vmem:[%s423 + $0xa8] sm:$0xff]
                %468 = vst [vmem:[%s424 + $0x148] sm:$0xff] %v467
                %v469 = vld [vmem:[%s423 + $0xb0] sm:$0xff]
                %470 = vst [vmem:[%s424 + $0x160] sm:$0xff] %v469
                %v471 = vld [vmem:[%s423 + $0xb8] sm:$0xff]
                %472 = vst [vmem:[%s424 + $0x168] sm:$0xff] %v471
                %v473 = vld [vmem:[%s423 + $0xc0] sm:$0xff]
                %474 = vst [vmem:[%s424 + $0x180] sm:$0xff] %v473
                %v475 = vld [vmem:[%s423 + $0xc8] sm:$0xff]
                %476 = vst [vmem:[%s424 + $0x188] sm:$0xff] %v475
                %v477 = vld [vmem:[%s423 + $0xd0] sm:$0xff]
                %478 = vst [vmem:[%s424 + $0x1a0] sm:$0xff] %v477
                %v479 = vld [vmem:[%s423 + $0xd8] sm:$0xff]
                %480 = vst [vmem:[%s424 + $0x1a8] sm:$0xff] %v479
              $region91: #{tpu_custom_call.1} parent=85 // loop_footer
                %s422 = sadd.s32 1, %s418
              $region92: #{tpu_custom_call.1} parent=85 // loop_footer_branch
                %417 = sbr.rel target = $region88
              $region93: #{tpu_custom_call.1} parent=85 // loop_exit
                _
            $region86: #{tpu_custom_call.1} parent=81 // pred_fallthru
              _
            // Predicated region
            $region94: #{tpu_custom_call.1} parent=81 // pred_check
              _
            $region95: #{tpu_custom_call.1} parent=81 // pred_check_branch
              %482 = sbr.rel target = $region97
            $region96: #{tpu_custom_call.1} parent=81 // pred_region
              _
            $region97: #{tpu_custom_call.1} parent=81 // pred_fallthru
              _
          $region82: #{tpu_custom_call.1} parent=77 // pred_fallthru
            _
          %483 = vnop
        $region78: #{tpu_custom_call.1} parent=65 // pred_fallthru
          _
      $region66: #{tpu_custom_call.1} parent=5 // pred_fallthru
        _
      %p484 = scmp.le.s32.totalorder 2, %s8
      // Predicated region
      $region98: #{tpu_custom_call.1} parent=5 // pred_check
        %p485 = pneg %p484
      $region99: #{tpu_custom_call.1} parent=5 // pred_check_branch
        %487 = sbr.rel (%p485) target = $region101
      $region100: #{tpu_custom_call.1} parent=5 // pred_region
        %s488 = ssub.s32 %s8, 2
        // Predicated region
        $region102: #{tpu_custom_call.1} parent=100 // pred_check
          %p489 = pneg %p105
        $region103: #{tpu_custom_call.1} parent=100 // pred_check_branch
          %491 = sbr.rel (%p489) target = $region105
        $region104: #{tpu_custom_call.1} parent=100 // pred_region
          %s492 = sand.u32 %s90, 1
          %s493 = sand.u32 %s90, 1
          %s494 = smul.addr %s493, 224
          %s495 = scalar_lea.vmem [#allocation4], %s494
        $region105: #{tpu_custom_call.1} parent=100 // pred_fallthru
          _
      $region101: #{tpu_custom_call.1} parent=5 // pred_fallthru
        _
    $region6: #{tpu_custom_call.1} parent=1 // loop_footer
      %s12 = sadd.s32 1, %s8
    $region7: #{tpu_custom_call.1} parent=1 // loop_footer_branch
      %7 = sbr.rel target = $region3
    $region8: #{tpu_custom_call.1} parent=1 // loop_exit
      _

</llo_original>
